<compile_context>
chip_gen: v7x
topology: tpu7x:2x2x1
jax: 0.10.0
libtpu: 0.0.40
codegen_flags: <defaults>
</compile_context>

<pallas_src>
import jax
import jax.numpy as jnp
from jax.experimental import pallas as pl
from jax.experimental.pallas import tpu as pltpu

# --- synthetic versions of the module-level constants referenced by model.py ---
pitch_sizes_parts = {'soprano': 8, 'bass': 8}
indices_parts = [0, 1]          # len == 2
indices_extra = [0, 1, 2]       # len == 3

SELU_ALPHA = 1.6732632423543772
SELU_SCALE = 1.0507009873554805


def _selu(x):
    # torch.nn.SELU semantics; clamp exp argument so the unselected branch can't inf.
    return SELU_SCALE * jnp.where(
        x > 0, x, SELU_ALPHA * (jnp.exp(jnp.minimum(x, 0.0)) - 1.0)
    )


def bachnet_continuo_kernel(s_ref, b_ref, e_ref,
                            w1s_ref, w1b_ref, w1e_ref, b1_ref,
                            w2_ref, b2_ref, w3t_ref, b3t_ref, ot_ref):
    # Layer 1: fused "concat + matmul" -- three bf16 partial matmuls, f32 accumulate.
    h = (jnp.dot(s_ref[...], w1s_ref[...], preferred_element_type=jnp.float32)
         + jnp.dot(b_ref[...], w1b_ref[...], preferred_element_type=jnp.float32)
         + jnp.dot(e_ref[...], w1e_ref[...], preferred_element_type=jnp.float32)
         + b1_ref[...])
    h = _selu(h)
    # TODO(synk): nn.Dropout is identity at inference time; training-mode dropout
    # masks (pltpu.prng_seed + prng_random_bits) are not emitted.
    h = jnp.dot(h.astype(w2_ref.dtype), w2_ref[...],
                preferred_element_type=jnp.float32) + b2_ref[...]
    h = _selu(h)
    # Layer 3 computed transposed for a lane-dense output slab:
    #   out^T (d_out, bm) = w3^T (d_out, hidden) @ h^T (hidden, bm) + b3^T
    # The (bm, hidden) -> (hidden, bm) transpose rides the otherwise-idle XLU slot.
    ot_ref[...] = (jnp.dot(w3t_ref[...], h.astype(w3t_ref.dtype).T,
                           preferred_element_type=jnp.float32)
                   + b3t_ref[...])


def _cdiv(a, b):
    return (a + b - 1) // b


def _round_up(x, m):
    return _cdiv(x, m) * m


def _choose_tiling(batch, bm):
    """Pick (bm_eff, padded_batch, n_tiles).

    The lane-dense (transposed) output requires the batch tile to be a multiple
    of 128 whenever the grid has more than one step (it is the lane dimension of
    the output block). Small batches use a single tile padded to a multiple of 8;
    larger batches use evenly sized 128-aligned tiles with at least 2 grid steps
    so v7x's two TensorCores both get work.
    """
    bm = max(128, _round_up(bm, 128))
    padded8 = _round_up(batch, 8)
    if padded8 <= bm and padded8 < 256:
        return padded8, padded8, 1
    padded128 = _round_up(batch, 128)
    n_tiles = max(_cdiv(padded128, bm), 2)
    bm_eff = _round_up(_cdiv(padded128, n_tiles), 128)
    padded = bm_eff * n_tiles
    return bm_eff, padded, n_tiles


def bachnet_continuo_forward(inputs, params, *, bm=2048):
    """Pallas implementation of BachNetTrainingContinuo.forward (inference)."""
    batch = inputs['soprano'].shape[0]

    # Flatten each part; concat order matches the PyTorch module:
    # ['soprano', 'bass', 'extra'].  bf16 streams halve the dominant HBM read.
    s = inputs['soprano'].reshape(batch, -1).astype(jnp.bfloat16)
    b = inputs['bass'].reshape(batch, -1).astype(jnp.bfloat16)
    e = inputs['extra'].reshape(batch, -1).astype(jnp.bfloat16)
    d_s, d_b, d_e = s.shape[1], b.shape[1], e.shape[1]
    d_in = d_s + d_b + d_e

    w1, b1, w2, b2, w3, b3 = params
    hidden = w1.shape[1]
    d_out = w3.shape[1]
    assert w1.shape[0] == d_in

    # Split w1 into row blocks matching the (soprano, bass, extra) concat order.
    w1s = w1[:d_s].astype(jnp.bfloat16)
    w1b = w1[d_s:d_s + d_b].astype(jnp.bfloat16)
    w1e = w1[d_s + d_b:].astype(jnp.bfloat16)
    w2b = w2.astype(jnp.bfloat16)
    w3t = w3.T.astype(jnp.bfloat16)                     # (d_out, hidden)
    b1f = b1.reshape(1, hidden).astype(jnp.float32)
    b2f = b2.reshape(1, hidden).astype(jnp.float32)
    b3t = b3.reshape(1, d_out).T.astype(jnp.float32)    # (d_out, 1)

    bm_eff, padded, n_tiles = _choose_tiling(batch, bm)
    if padded != batch:
        pad = padded - batch
        s = jnp.pad(s, ((0, pad), (0, 0)))
        b = jnp.pad(b, ((0, pad), (0, 0)))
        e = jnp.pad(e, ((0, pad), (0, 0)))

    cost = pl.CostEstimate(
        flops=2 * padded * (d_in * hidden + hidden * hidden + hidden * d_out),
        transcendentals=2 * padded * hidden,
        bytes_accessed=(2 * (padded * d_in
                             + d_in * hidden + hidden * hidden + hidden * d_out)
                        + 4 * (padded * d_out + 2 * hidden + d_out)),
    )

    const = lambda i: (0, 0)   # weights / biases: resident, same block every step
    out_t = pl.pallas_call(
        bachnet_continuo_kernel,
        out_shape=jax.ShapeDtypeStruct((d_out, padded), jnp.float32),
        grid_spec=pltpu.PrefetchScalarGridSpec(
            num_scalar_prefetch=0,
            grid=(n_tiles,),
            in_specs=[
                pl.BlockSpec((bm_eff, d_s), lambda i: (i, 0)),   # soprano tile
                pl.BlockSpec((bm_eff, d_b), lambda i: (i, 0)),   # bass tile
                pl.BlockSpec((bm_eff, d_e), lambda i: (i, 0)),   # extra tile
                pl.BlockSpec((d_s, hidden), const),
                pl.BlockSpec((d_b, hidden), const),
                pl.BlockSpec((d_e, hidden), const),
                pl.BlockSpec((1, hidden), const),
                pl.BlockSpec((hidden, hidden), const),
                pl.BlockSpec((1, hidden), const),
                pl.BlockSpec((d_out, hidden), const),
                pl.BlockSpec((d_out, 1), const),
            ],
            out_specs=pl.BlockSpec((d_out, bm_eff), lambda i: (0, i)),
        ),
        compiler_params=pltpu.CompilerParams(dimension_semantics=("parallel",)),
        cost_estimate=cost,
    )(s, b, e, w1s, w1b, w1e, b1f, w2b, b2f, w3t, b3t)

    # (d_out, padded) lane-dense kernel output -> (batch, d_out) module output.
    return {'bass': out_t.T[:batch]}


def _reference_forward(inputs, params):
    batch = inputs['soprano'].shape[0]
    x = jnp.concatenate(
        [inputs[k].reshape(batch, -1) for k in ('soprano', 'bass', 'extra')], axis=1
    ).astype(jnp.float32)
    w1, b1, w2, b2, w3, b3 = params
    h = _selu(x @ w1 + b1)
    h = _selu(h @ w2 + b2)
    return {'bass': h @ w3 + b3}


def _init_params(key, d_in, hidden, d_out):
    ks = jax.random.split(key, 6)

    def lin(kw, kb, fan_in, fan_out):
        bound = 1.0 / (fan_in ** 0.5)
        w = jax.random.uniform(kw, (fan_in, fan_out), jnp.float32, -bound, bound)
        b = jax.random.uniform(kb, (1, fan_out), jnp.float32, -bound, bound)
        return w, b

    w1, b1 = lin(ks[0], ks[1], d_in, hidden)
    w2, b2 = lin(ks[2], ks[3], hidden, hidden)
    w3, b3 = lin(ks[4], ks[5], hidden, d_out)
    return (w1, b1, w2, b2, w3, b3)


if __name__ == "__main__":
    hidden_size = 32
    context_radius = 2

    n_parts = len(indices_parts)
    n_extra = len(indices_extra)
    sop_feat = pitch_sizes_parts['soprano'] + n_parts   # 10
    bass_feat = pitch_sizes_parts['bass'] + n_parts     # 10

    d_in = ((2 * context_radius + 1) * sop_feat
            + (2 * context_radius + 1) * n_extra
            + context_radius * bass_feat)                # 50 + 15 + 20 = 85
    d_out = bass_feat                                    # 10

    key = jax.random.PRNGKey(0)
    k_sop, k_bass, k_extra, k_params = jax.random.split(key, 4)
    params = _init_params(k_params, d_in, hidden_size, d_out)

    def make_inputs(batch, k1, k2, k3):
        return {
            'soprano': jax.random.normal(
                k1, (batch, 2 * context_radius + 1, sop_feat), jnp.float32),
            'bass': jax.random.normal(
                k2, (batch, context_radius, bass_feat), jnp.float32),
            'extra': jax.random.normal(
                k3, (batch, 2 * context_radius + 1, n_extra), jnp.float32),
        }

    # bf16 streams vs. f32 reference -> relaxed tolerance (f32 accumulation kept).
    TOL = 3e-2

    # Case 1: small odd batch (20) -> single-tile path, batch padded to 24.
    inputs1 = make_inputs(20, k_sop, k_bass, k_extra)
    out1 = jax.block_until_ready(bachnet_continuo_forward(inputs1, params)['bass'])
    ref1 = _reference_forward(inputs1, params)['bass']
    assert out1.shape == (20, d_out)
    assert jnp.allclose(out1, ref1, atol=TOL, rtol=TOL), float(jnp.max(jnp.abs(out1 - ref1)))

    # Case 2: batch 300 with bm=128 -> 3 grid steps of 128, exercises the
    # multi-tile lane-dense (transposed) output path and row padding.
    inputs2 = make_inputs(300, k_bass, k_extra, k_sop)
    out2 = jax.block_until_ready(
        bachnet_continuo_forward(inputs2, params, bm=128)['bass'])
    ref2 = _reference_forward(inputs2, params)['bass']
    assert out2.shape == (300, d_out)
    assert jnp.allclose(out2, ref2, atol=TOL, rtol=TOL), float(jnp.max(jnp.abs(out2 - ref2)))

    print("KERNEL_OK")
</pallas_src>

<mosaic_0001>
module attributes {stable_mosaic.version = 11 : i64} {
  func.func @bachnet_continuo_kernel(%arg0: i32, %arg1: memref<24x50xbf16, #tpu.memory_space<vmem>>, %arg2: memref<24x20xbf16, #tpu.memory_space<vmem>>, %arg3: memref<24x15xbf16, #tpu.memory_space<vmem>>, %arg4: memref<50x32xbf16, #tpu.memory_space<vmem>>, %arg5: memref<20x32xbf16, #tpu.memory_space<vmem>>, %arg6: memref<15x32xbf16, #tpu.memory_space<vmem>>, %arg7: memref<1x32xf32, #tpu.memory_space<vmem>>, %arg8: memref<32x32xbf16, #tpu.memory_space<vmem>>, %arg9: memref<1x32xf32, #tpu.memory_space<vmem>>, %arg10: memref<10x32xbf16, #tpu.memory_space<vmem>>, %arg11: memref<10x1xf32, #tpu.memory_space<vmem>>, %arg12: memref<10x24xf32, #tpu.memory_space<vmem>>) attributes {dimension_semantics = [#tpu.dimension_semantics<parallel>], iteration_bounds = array<i64: 1>, scalar_prefetch = 0 : i64, scratch_operands = 0 : i64, tpu.core_type = #tpu.core_type<tc>, window_params = [{transform_indices = @transform_0, window_bounds = array<i64: 24, 50>}, {transform_indices = @transform_1, window_bounds = array<i64: 24, 20>}, {transform_indices = @transform_2, window_bounds = array<i64: 24, 15>}, {pipeline_mode = #tpu.pipeline_mode<synchronous>, transform_indices = @transform_3, window_bounds = array<i64: 50, 32>}, {pipeline_mode = #tpu.pipeline_mode<synchronous>, transform_indices = @transform_4, window_bounds = array<i64: 20, 32>}, {pipeline_mode = #tpu.pipeline_mode<synchronous>, transform_indices = @transform_5, window_bounds = array<i64: 15, 32>}, {pipeline_mode = #tpu.pipeline_mode<synchronous>, transform_indices = @transform_6, window_bounds = array<i64: 1, 32>}, {pipeline_mode = #tpu.pipeline_mode<synchronous>, transform_indices = @transform_7, window_bounds = array<i64: 32, 32>}, {pipeline_mode = #tpu.pipeline_mode<synchronous>, transform_indices = @transform_8, window_bounds = array<i64: 1, 32>}, {pipeline_mode = #tpu.pipeline_mode<synchronous>, transform_indices = @transform_9, window_bounds = array<i64: 10, 32>}, {pipeline_mode = #tpu.pipeline_mode<synchronous>, transform_indices = @transform_10, window_bounds = array<i64: 10, 1>}, {transform_indices = @transform_11, window_bounds = array<i64: 10, 24>}]} {
    %c0 = arith.constant 0 : index
    %c0_0 = arith.constant 0 : index
    %0 = vector.load %arg1[%c0, %c0_0] : memref<24x50xbf16, #tpu.memory_space<vmem>>, vector<24x50xbf16>
    %c0_1 = arith.constant 0 : index
    %c0_2 = arith.constant 0 : index
    %1 = vector.load %arg4[%c0_1, %c0_2] : memref<50x32xbf16, #tpu.memory_space<vmem>>, vector<50x32xbf16>
    %cst = arith.constant dense<0.000000e+00> : vector<24x32xf32>
    %2 = tpu.matmul %0, %1, %cst {dimension_numbers = #tpu.dot_dimension_numbers<[1], [0], [0], [1], [0, 0, 1, 1], [], []>} : vector<24x50xbf16>, vector<50x32xbf16>, vector<24x32xf32> -> vector<24x32xf32>
    %c0_3 = arith.constant 0 : index
    %c0_4 = arith.constant 0 : index
    %3 = vector.load %arg2[%c0_3, %c0_4] : memref<24x20xbf16, #tpu.memory_space<vmem>>, vector<24x20xbf16>
    %c0_5 = arith.constant 0 : index
    %c0_6 = arith.constant 0 : index
    %4 = vector.load %arg5[%c0_5, %c0_6] : memref<20x32xbf16, #tpu.memory_space<vmem>>, vector<20x32xbf16>
    %cst_7 = arith.constant dense<0.000000e+00> : vector<24x32xf32>
    %5 = tpu.matmul %3, %4, %cst_7 {dimension_numbers = #tpu.dot_dimension_numbers<[1], [0], [0], [1], [0, 0, 1, 1], [], []>} : vector<24x20xbf16>, vector<20x32xbf16>, vector<24x32xf32> -> vector<24x32xf32>
    %6 = arith.addf %2, %5 : vector<24x32xf32>
    %c0_8 = arith.constant 0 : index
    %c0_9 = arith.constant 0 : index
    %7 = vector.load %arg3[%c0_8, %c0_9] : memref<24x15xbf16, #tpu.memory_space<vmem>>, vector<24x15xbf16>
    %c0_10 = arith.constant 0 : index
    %c0_11 = arith.constant 0 : index
    %8 = vector.load %arg6[%c0_10, %c0_11] : memref<15x32xbf16, #tpu.memory_space<vmem>>, vector<15x32xbf16>
    %cst_12 = arith.constant dense<0.000000e+00> : vector<24x32xf32>
    %9 = tpu.matmul %7, %8, %cst_12 {dimension_numbers = #tpu.dot_dimension_numbers<[1], [0], [0], [1], [0, 0, 1, 1], [], []>} : vector<24x15xbf16>, vector<15x32xbf16>, vector<24x32xf32> -> vector<24x32xf32>
    %10 = arith.addf %6, %9 : vector<24x32xf32>
    %c0_13 = arith.constant 0 : index
    %c0_14 = arith.constant 0 : index
    %11 = vector.load %arg7[%c0_13, %c0_14] : memref<1x32xf32, #tpu.memory_space<vmem>>, vector<1x32xf32>
    %12 = vector.broadcast %11 : vector<1x32xf32> to vector<24x32xf32>
    %13 = arith.addf %10, %12 : vector<24x32xf32>
    %cst_15 = arith.constant 0.000000e+00 : f32
    %14 = vector.broadcast %cst_15 : f32 to vector<24x32xf32>
    %15 = arith.cmpf ogt, %13, %14 : vector<24x32xf32>
    %cst_16 = arith.constant 0.000000e+00 : f32
    %16 = vector.broadcast %cst_16 : f32 to vector<24x32xf32>
    %17 = arith.minimumf %13, %16 : vector<24x32xf32>
    %18 = math.exp %17 : vector<24x32xf32>
    %cst_17 = arith.constant 1.000000e+00 : f32
    %19 = vector.broadcast %cst_17 : f32 to vector<24x32xf32>
    %20 = arith.subf %18, %19 : vector<24x32xf32>
    %cst_18 = arith.constant 1.67326319 : f32
    %21 = vector.broadcast %cst_18 : f32 to vector<24x32xf32>
    %22 = arith.mulf %21, %20 : vector<24x32xf32>
    %23 = arith.select %15, %13, %22 : vector<24x32xi1>, vector<24x32xf32>
    %cst_19 = arith.constant 1.05070102 : f32
    %24 = vector.broadcast %cst_19 : f32 to vector<24x32xf32>
    %25 = arith.mulf %24, %23 : vector<24x32xf32>
    %26 = arith.truncf %25 : vector<24x32xf32> to vector<24x32xbf16>
    %c0_20 = arith.constant 0 : index
    %c0_21 = arith.constant 0 : index
    %27 = vector.load %arg8[%c0_20, %c0_21] : memref<32x32xbf16, #tpu.memory_space<vmem>>, vector<32x32xbf16>
    %cst_22 = arith.constant dense<0.000000e+00> : vector<24x32xf32>
    %28 = tpu.matmul %26, %27, %cst_22 {dimension_numbers = #tpu.dot_dimension_numbers<[1], [0], [0], [1], [0, 0, 1, 1], [], []>} : vector<24x32xbf16>, vector<32x32xbf16>, vector<24x32xf32> -> vector<24x32xf32>
    %c0_23 = arith.constant 0 : index
    %c0_24 = arith.constant 0 : index
    %29 = vector.load %arg9[%c0_23, %c0_24] : memref<1x32xf32, #tpu.memory_space<vmem>>, vector<1x32xf32>
    %30 = vector.broadcast %29 : vector<1x32xf32> to vector<24x32xf32>
    %31 = arith.addf %28, %30 : vector<24x32xf32>
    %cst_25 = arith.constant 0.000000e+00 : f32
    %32 = vector.broadcast %cst_25 : f32 to vector<24x32xf32>
    %33 = arith.cmpf ogt, %31, %32 : vector<24x32xf32>
    %cst_26 = arith.constant 0.000000e+00 : f32
    %34 = vector.broadcast %cst_26 : f32 to vector<24x32xf32>
    %35 = arith.minimumf %31, %34 : vector<24x32xf32>
    %36 = math.exp %35 : vector<24x32xf32>
    %cst_27 = arith.constant 1.000000e+00 : f32
    %37 = vector.broadcast %cst_27 : f32 to vector<24x32xf32>
    %38 = arith.subf %36, %37 : vector<24x32xf32>
    %cst_28 = arith.constant 1.67326319 : f32
    %39 = vector.broadcast %cst_28 : f32 to vector<24x32xf32>
    %40 = arith.mulf %39, %38 : vector<24x32xf32>
    %41 = arith.select %33, %31, %40 : vector<24x32xi1>, vector<24x32xf32>
    %cst_29 = arith.constant 1.05070102 : f32
    %42 = vector.broadcast %cst_29 : f32 to vector<24x32xf32>
    %43 = arith.mulf %42, %41 : vector<24x32xf32>
    %c0_30 = arith.constant 0 : index
    %c0_31 = arith.constant 0 : index
    %44 = vector.load %arg10[%c0_30, %c0_31] : memref<10x32xbf16, #tpu.memory_space<vmem>>, vector<10x32xbf16>
    %45 = arith.truncf %43 : vector<24x32xf32> to vector<24x32xbf16>
    %46 = tpu.transpose %45, [1, 0] : vector<24x32xbf16> -> vector<32x24xbf16>
    %cst_32 = arith.constant dense<0.000000e+00> : vector<10x24xf32>
    %47 = tpu.matmul %44, %46, %cst_32 {dimension_numbers = #tpu.dot_dimension_numbers<[1], [0], [0], [1], [0, 0, 1, 1], [], []>} : vector<10x32xbf16>, vector<32x24xbf16>, vector<10x24xf32> -> vector<10x24xf32>
    %c0_33 = arith.constant 0 : index
    %c0_34 = arith.constant 0 : index
    %48 = vector.load %arg11[%c0_33, %c0_34] : memref<10x1xf32, #tpu.memory_space<vmem>>, vector<10x1xf32>
    %49 = vector.broadcast %48 : vector<10x1xf32> to vector<10x24xf32>
    %50 = arith.addf %47, %49 : vector<10x24xf32>
    %c0_35 = arith.constant 0 : index
    %c0_36 = arith.constant 0 : index
    %51 = vector.load %arg12[%c0_35, %c0_36] : memref<10x24xf32, #tpu.memory_space<vmem>>, vector<10x24xf32>
    tpu.vector_store %arg12[%c0_35, %c0_36], %50 {strides = array<i32>} : memref<10x24xf32, #tpu.memory_space<vmem>>, vector<10x24xf32>,
    return
  }
  func.func @transform_0(%arg0: i32) -> (i32, i32) {
    %c0_i32 = arith.constant 0 : i32
    %c0_i32_0 = arith.constant 0 : i32
    return %arg0, %c0_i32 : i32, i32
  }
  func.func @transform_1(%arg0: i32) -> (i32, i32) {
    %c0_i32 = arith.constant 0 : i32
    %c0_i32_0 = arith.constant 0 : i32
    return %arg0, %c0_i32 : i32, i32
  }
  func.func @transform_2(%arg0: i32) -> (i32, i32) {
    %c0_i32 = arith.constant 0 : i32
    %c0_i32_0 = arith.constant 0 : i32
    return %arg0, %c0_i32 : i32, i32
  }
  func.func @transform_3(%arg0: i32) -> (i32, i32) {
    %c0_i32 = arith.constant 0 : i32
    %c0_i32_0 = arith.constant 0 : i32
    %c0_i32_1 = arith.constant 0 : i32
    return %c0_i32, %c0_i32_0 : i32, i32
  }
  func.func @transform_4(%arg0: i32) -> (i32, i32) {
    %c0_i32 = arith.constant 0 : i32
    %c0_i32_0 = arith.constant 0 : i32
    %c0_i32_1 = arith.constant 0 : i32
    return %c0_i32, %c0_i32_0 : i32, i32
  }
  func.func @transform_5(%arg0: i32) -> (i32, i32) {
    %c0_i32 = arith.constant 0 : i32
    %c0_i32_0 = arith.constant 0 : i32
    %c0_i32_1 = arith.constant 0 : i32
    return %c0_i32, %c0_i32_0 : i32, i32
  }
  func.func @transform_6(%arg0: i32) -> (i32, i32) {
    %c0_i32 = arith.constant 0 : i32
    %c0_i32_0 = arith.constant 0 : i32
    %c0_i32_1 = arith.constant 0 : i32
    return %c0_i32, %c0_i32_0 : i32, i32
  }
  func.func @transform_7(%arg0: i32) -> (i32, i32) {
    %c0_i32 = arith.constant 0 : i32
    %c0_i32_0 = arith.constant 0 : i32
    %c0_i32_1 = arith.constant 0 : i32
    return %c0_i32, %c0_i32_0 : i32, i32
  }
  func.func @transform_8(%arg0: i32) -> (i32, i32) {
    %c0_i32 = arith.constant 0 : i32
    %c0_i32_0 = arith.constant 0 : i32
    %c0_i32_1 = arith.constant 0 : i32
    return %c0_i32, %c0_i32_0 : i32, i32
  }
  func.func @transform_9(%arg0: i32) -> (i32, i32) {
    %c0_i32 = arith.constant 0 : i32
    %c0_i32_0 = arith.constant 0 : i32
    %c0_i32_1 = arith.constant 0 : i32
    return %c0_i32, %c0_i32_0 : i32, i32
  }
  func.func @transform_10(%arg0: i32) -> (i32, i32) {
    %c0_i32 = arith.constant 0 : i32
    %c0_i32_0 = arith.constant 0 : i32
    %c0_i32_1 = arith.constant 0 : i32
    return %c0_i32, %c0_i32_0 : i32, i32
  }
  func.func @transform_11(%arg0: i32) -> (i32, i32) {
    %c0_i32 = arith.constant 0 : i32
    %c0_i32_0 = arith.constant 0 : i32
    return %c0_i32, %arg0 : i32, i32
  }
}

</mosaic_0001>

<llo_original>
// kernel: tpu_custom_call.1
$region0: #{tpu_custom_call.1}
  #allocation0 [shape = 'u32[]', space=smem, size = 0x4, offset = 0x4, fixed_abs, tag = 'smem constant byte address 0x4 - core index']
  #allocation1 [shape = 'u32[144,128]{1,0:T(1,128)}', space=vmem, size = 0x12000, scoped, tag = 'internal scratch']
  %s0 = inlined_call_operand.vmem [shape: bf16[24,50], index: 0, kind: input, shape index: {}]
  %s1 = inlined_call_operand.vmem [shape: bf16[24,20], index: 1, kind: input, shape index: {}]
  %s2 = inlined_call_operand.vmem [shape: bf16[24,15], index: 2, kind: input, shape index: {}]
  %s3 = inlined_call_operand.vmem [shape: bf16[50,32], index: 3, kind: input, shape index: {}]
  %s4 = inlined_call_operand.vmem [shape: bf16[20,32], index: 4, kind: input, shape index: {}]
  %s5 = inlined_call_operand.vmem [shape: bf16[15,32], index: 5, kind: input, shape index: {}]
  %s6 = inlined_call_operand.vmem [shape: f32[1,32], index: 6, kind: input, shape index: {}]
  %s7 = inlined_call_operand.vmem [shape: bf16[32,32], index: 7, kind: input, shape index: {}]
  %s8 = inlined_call_operand.vmem [shape: f32[1,32], index: 8, kind: input, shape index: {}]
  %s9 = inlined_call_operand.vmem [shape: bf16[10,32], index: 9, kind: input, shape index: {}]
  %s10 = inlined_call_operand.vmem [shape: f32[10,1], index: 10, kind: input, shape index: {}]
  %s11 = inlined_call_operand.hbm [shape: f32[10,24], index: 11, kind: output, shape index: {}]
  %s12 = sld [smem:[#allocation0]]
  $region54: #{tpu_custom_call.1} parent=0
    _
  %s14 = ssub.s32 1, %s12
  %s15 = scalar_select 0, %s14, %s12
  $region1: #{tpu_custom_call.1} parent=0
    #allocation2 [shape = 'u8[8192]{0}', space=vmem, size = 0x2000, scoped, tag = 'output window, operand 0, single buffered']
    #allocation3 [shape = 's32[1]{0}', space=sflag, size = 0x4, scoped, tag = 'scoped memory for tpu_custom_call.1']
    %16 = vsyncpa [#allocation3], 0
    // Predicated region
    $region2: #{tpu_custom_call.1} parent=1 // pred_check
      _
    $region3: #{tpu_custom_call.1} parent=1 // pred_check_branch
      %18 = sbr.rel (0) target = $region5
    $region4: #{tpu_custom_call.1} parent=1 // pred_region
      _
    $region5: #{tpu_custom_call.1} parent=1 // pred_fallthru
      _
    // Predicated region
    $region6: #{tpu_custom_call.1} parent=1 // pred_check
      _
    $region7: #{tpu_custom_call.1} parent=1 // pred_check_branch
      %20 = sbr.rel (0) target = $region9
    $region8: #{tpu_custom_call.1} parent=1 // pred_region
      _
    $region9: #{tpu_custom_call.1} parent=1 // pred_fallthru
      _
    // Predicated region
    $region10: #{tpu_custom_call.1} parent=1 // pred_check
      _
    $region11: #{tpu_custom_call.1} parent=1 // pred_check_branch
      %22 = sbr.rel (0) target = $region13
    $region12: #{tpu_custom_call.1} parent=1 // pred_region
      _
    $region13: #{tpu_custom_call.1} parent=1 // pred_fallthru
      _
    // Predicated region
    $region14: #{tpu_custom_call.1} parent=1 // pred_check
      _
    $region15: #{tpu_custom_call.1} parent=1 // pred_check_branch
      %24 = sbr.rel (0) target = $region17
    $region16: #{tpu_custom_call.1} parent=1 // pred_region
      _
    $region17: #{tpu_custom_call.1} parent=1 // pred_fallthru
      _
    // Predicated region
    $region18: #{tpu_custom_call.1} parent=1 // pred_check
      _
    $region19: #{tpu_custom_call.1} parent=1 // pred_check_branch
      %26 = sbr.rel (0) target = $region21
    $region20: #{tpu_custom_call.1} parent=1 // pred_region
      _
    $region21: #{tpu_custom_call.1} parent=1 // pred_fallthru
      _
    // Predicated region
    $region22: #{tpu_custom_call.1} parent=1 // pred_check
      _
    $region23: #{tpu_custom_call.1} parent=1 // pred_check_branch
      %28 = sbr.rel (0) target = $region25
    $region24: #{tpu_custom_call.1} parent=1 // pred_region
      _
    $region25: #{tpu_custom_call.1} parent=1 // pred_fallthru
      _
    // Predicated region
    $region26: #{tpu_custom_call.1} parent=1 // pred_check
      _
    $region27: #{tpu_custom_call.1} parent=1 // pred_check_branch
      %30 = sbr.rel (0) target = $region29
    $region28: #{tpu_custom_call.1} parent=1 // pred_region
      _
    $region29: #{tpu_custom_call.1} parent=1 // pred_fallthru
      _
    // Predicated region
    $region30: #{tpu_custom_call.1} parent=1 // pred_check
      _
    $region31: #{tpu_custom_call.1} parent=1 // pred_check_branch
      %32 = sbr.rel (0) target = $region33
    $region32: #{tpu_custom_call.1} parent=1 // pred_region
      _
    $region33: #{tpu_custom_call.1} parent=1 // pred_fallthru
      _
    // Predicated region
    $region34: #{tpu_custom_call.1} parent=1 // pred_check
      _
    $region35: #{tpu_custom_call.1} parent=1 // pred_check_branch
      %34 = sbr.rel (0) target = $region37
    $region36: #{tpu_custom_call.1} parent=1 // pred_region
      _
    $region37: #{tpu_custom_call.1} parent=1 // pred_fallthru
      _
    // Predicated region
    $region38: #{tpu_custom_call.1} parent=1 // pred_check
      _
    $region39: #{tpu_custom_call.1} parent=1 // pred_check_branch
      %36 = sbr.rel (0) target = $region41
    $region40: #{tpu_custom_call.1} parent=1 // pred_region
      _
    $region41: #{tpu_custom_call.1} parent=1 // pred_fallthru
      _
    // Predicated region
    $region42: #{tpu_custom_call.1} parent=1 // pred_check
      _
    $region43: #{tpu_custom_call.1} parent=1 // pred_check_branch
      %38 = sbr.rel (0) target = $region45
    $region44: #{tpu_custom_call.1} parent=1 // pred_region
      _
    $region45: #{tpu_custom_call.1} parent=1 // pred_fallthru
      _
    %v40 = vld [vmem:[%s0] sm:$0xf]
    %v41 = vld [vmem:[%s0 + $0x4] sm:$0xf]
    %v42 = vld [vmem:[%s0 + $0x8] sm:$0xf]
    %v43 = vld [vmem:[%s3] sm:$0xf]
    %v44 = vld [vmem:[%s3 + $0x4] sm:$0xf]
    %v45 = vld [vmem:[%s3 + $0x8] sm:$0xf]
    %v46 = vld [vmem:[%s3 + $0xc] sm:$0xf]
    %v47 = vld [vmem:[%s3 + $0x10] sm:$0xf]
    %v48 = vld [vmem:[%s3 + $0x14] sm:$0xf]
    %v49 = vld [vmem:[%s3 + $0x18] sm:$0x1]
    %v50 = vld [vmem:[%s1] sm:$0xf]
    %v51 = vld [vmem:[%s1 + $0x4] sm:$0xf]
    %v52 = vld [vmem:[%s1 + $0x8] sm:$0xf]
    %v53 = vld [vmem:[%s4] sm:$0xf]
    %v54 = vld [vmem:[%s4 + $0x4] sm:$0xf]
    %v55 = vld [vmem:[%s4 + $0x8] sm:$0x3]
    %v59 = vunpack.c.l.b16 %v50
    %v60 = vunpack.c.l.b16 %v51
    %v61 = vunpack.c.l.b16 %v52
    %v62 = vpack.c.b16 %v60, %v59
    %v63 = vpack.c.b16 %v61, %v61
    %v67 = vunpack.c.l.b16 %v53
    %v68 = vunpack.c.l.b16 %v54
    %v69 = vunpack.c.l.b16 %v55
    %v70 = vpack.c.b16 %v68, %v67
    %v71 = vpack.c.b16 %v69, %v69
    %vm73 = vcmask 162816
    %v75 = vsel %vm73, %v62, 0
    %v78 = vsel %vm73, %v63, 0
    %vm80 = vcmask 1041408
    %v82 = vsel %vm80, %v71, 0
    %84 = vmatprep.subr.bf16.mxu0 0
    %85 = vmatpush1.bf16.msra.mxu0 %v70
    %86 = vmatprep.subr.bf16.mxu0 0
    %87 = vmatpush1.bf16.msra.mxu0 %v82
    %88 = vmatprep.subr.bf16.mxu0 0
    %89 = vmatpush1.bf16.msra.mxu0 0
    %90 = vmatprep.subr.bf16.mxu0 0
    %91 = vmatpush1.bf16.msra.mxu0 0
    %92 = vmatprep.subr.bf16.mxu0 0
    %93 = vmatpush1.bf16.msra.mxu0 0
    %94 = vmatprep.subr.bf16.mxu0 0
    %95 = vmatpush1.bf16.msra.mxu0 0
    %96 = vmatprep.subr.bf16.mxu0 0
    %97 = vmatpush1.bf16.msra.mxu0 0
    %98 = vmatprep.subr.bf16.mxu0 0
    %99 = vmatpush1.bf16.msra.mxu0 0
    %100 = vmatprep.subr.bf16.mxu0 0
    %101 = vmatpush1.bf16.msra.mxu0 0
    %102 = vmatprep.subr.bf16.mxu0 0
    %103 = vmatpush1.bf16.msra.mxu0 0
    %104 = vmatprep.subr.bf16.mxu0 0
    %105 = vmatpush1.bf16.msra.mxu0 0
    %106 = vmatprep.subr.bf16.mxu0 0
    %107 = vmatpush1.bf16.msra.mxu0 0
    %108 = vmatprep.subr.bf16.mxu0 0
    %109 = vmatpush1.bf16.msra.mxu0 0
    %110 = vmatprep.subr.bf16.mxu0 0
    %111 = vmatpush1.bf16.msra.mxu0 0
    %112 = vmatprep.subr.bf16.mxu0 0
    %113 = vmatpush1.bf16.msra.mxu0 0
    %114 = vmatprep.subr.bf16.mxu0 0
    %115 = vmatpush1.bf16.msra.mxu0 0
    %116 = vmatprep.mubr.bf16.mxu0 0
    %117 = vmatmul.mubr.bf16.gmra.mrb[0].mxu0 %v75
    %v118 = vpop.f32.mrb[0].mxu0
    %v119 = vadd.f32 0.0, %v118
    %v120 = vpop.f32.mrb[0].mxu0
    %v121 = vpop.f32.mrb[0].mxu0
    %v122 = vadd.f32 0.0, %v121
    %v123 = vpop.f32.mrb[0].mxu0
    %124 = vmatprep.mubr.bf16.mxu0 0
    %125 = vmatmul.mubr.bf16.gmra.mrb[0].mxu0 %v78
    %v126 = vpop.f32.mrb[0].mxu0
    %v127 = vadd.f32 0.0, %v126
    %v128 = vpop.f32.mrb[0].mxu0
    %v129 = vpop.f32.mrb[0].mxu0
    %v130 = vpop.f32.mrb[0].mxu0
    %131 = vdwg.mxu0
    %v135 = vunpack.c.l.b16 %v40
    %v136 = vunpack.c.l.b16 %v41
    %v137 = vunpack.c.l.b16 %v42
    %v138 = vpack.c.b16 %v136, %v135
    %v139 = vpack.c.b16 %v137, %v137
    %v147 = vunpack.c.l.b16 %v43
    %v148 = vunpack.c.l.b16 %v44
    %v149 = vunpack.c.l.b16 %v45
    %v150 = vunpack.c.l.b16 %v46
    %v151 = vunpack.c.l.b16 %v47
    %v152 = vunpack.c.l.b16 %v48
    %v153 = vunpack.c.l.b16 %v49
    %v154 = vpack.c.b16 %v148, %v147
    %v155 = vpack.c.b16 %v150, %v149
    %v156 = vpack.c.b16 %v152, %v151
    %v157 = vpack.c.b16 %v153, %v153
    %vm161 = vcmask 408576
    %v163 = vsel %vm161, %v138, 0
    %v166 = vsel %vm161, %v139, 0
    %vm168 = vcmask 1040384
    %v170 = vsel %vm168, %v157, 0
    %172 = vmatprep.subr.bf16.mxu0 0
    %173 = vmatpush1.bf16.msra.mxu0 %v154
    %174 = vmatprep.subr.bf16.mxu0 0
    %175 = vmatpush1.bf16.msra.mxu0 %v155
    %176 = vmatprep.subr.bf16.mxu0 0
    %177 = vmatpush1.bf16.msra.mxu0 %v156
    %178 = vmatprep.subr.bf16.mxu0 0
    %179 = vmatpush1.bf16.msra.mxu0 %v170
    %180 = vmatprep.subr.bf16.mxu0 0
    %181 = vmatpush1.bf16.msra.mxu0 0
    %182 = vmatprep.subr.bf16.mxu0 0
    %183 = vmatpush1.bf16.msra.mxu0 0
    %184 = vmatprep.subr.bf16.mxu0 0
    %185 = vmatpush1.bf16.msra.mxu0 0
    %186 = vmatprep.subr.bf16.mxu0 0
    %187 = vmatpush1.bf16.msra.mxu0 0
    %188 = vmatprep.subr.bf16.mxu0 0
    %189 = vmatpush1.bf16.msra.mxu0 0
    %190 = vmatprep.subr.bf16.mxu0 0
    %191 = vmatpush1.bf16.msra.mxu0 0
    %192 = vmatprep.subr.bf16.mxu0 0
    %193 = vmatpush1.bf16.msra.mxu0 0
    %194 = vmatprep.subr.bf16.mxu0 0
    %195 = vmatpush1.bf16.msra.mxu0 0
    %196 = vmatprep.subr.bf16.mxu0 0
    %197 = vmatpush1.bf16.msra.mxu0 0
    %198 = vmatprep.subr.bf16.mxu0 0
    %199 = vmatpush1.bf16.msra.mxu0 0
    %200 = vmatprep.subr.bf16.mxu0 0
    %201 = vmatpush1.bf16.msra.mxu0 0
    %202 = vmatprep.subr.bf16.mxu0 0
    %203 = vmatpush1.bf16.msra.mxu0 0
    %204 = vmatprep.mubr.bf16.mxu0 0
    %205 = vmatmul.mubr.bf16.gmra.mrb[0].mxu0 %v163
    %v206 = vpop.f32.mrb[0].mxu0
    %v207 = vadd.f32 %v119, %v206
    %v208 = vpop.f32.mrb[0].mxu0
    %v209 = vpop.f32.mrb[0].mxu0
    %v210 = vadd.f32 %v122, %v209
    %v211 = vpop.f32.mrb[0].mxu0
    %212 = vmatprep.mubr.bf16.mxu0 0
    %213 = vmatmul.mubr.bf16.gmra.mrb[0].mxu0 %v166
    %v214 = vpop.f32.mrb[0].mxu0
    %v215 = vadd.f32 %v127, %v214
    %v216 = vpop.f32.mrb[0].mxu0
    %v217 = vpop.f32.mrb[0].mxu0
    %v218 = vpop.f32.mrb[0].mxu0
    %219 = vdwg.mxu0
    %v220 = vld [vmem:[%s2] sm:$0xf]
    %v221 = vld [vmem:[%s2 + $0x4] sm:$0xf]
    %v222 = vld [vmem:[%s2 + $0x8] sm:$0xf]
    %v223 = vld [vmem:[%s5] sm:$0xf]
    %v224 = vld [vmem:[%s5 + $0x4] sm:$0xf]
    %v228 = vunpack.c.l.b16 %v220
    %v229 = vunpack.c.l.b16 %v221
    %v230 = vunpack.c.l.b16 %v222
    %v231 = vpack.c.b16 %v229, %v228
    %v232 = vpack.c.b16 %v230, %v230
    %v235 = vunpack.c.l.b16 %v223
    %v236 = vunpack.c.l.b16 %v224
    %v237 = vpack.c.b16 %v236, %v235
    %vm238 = vcmask 121856
    %v240 = vsel %vm238, %v231, 0
    %v243 = vsel %vm238, %v232, 0
    %vm245 = vcmask 1046528
    %vm246 = vcmask 1047552
    %v247 = vsel %vm245, 4294967295, 65535
    %v248 = vsel %vm246, %v247, 0
    %v250 = vand.u32 %v237, %v248
    %252 = vmatprep.subr.bf16.mxu0 0
    %253 = vmatpush1.bf16.msra.mxu0 %v250
    %254 = vmatprep.subr.bf16.mxu0 0
    %255 = vmatpush1.bf16.msra.mxu0 0
    %256 = vmatprep.subr.bf16.mxu0 0
    %257 = vmatpush1.bf16.msra.mxu0 0
    %258 = vmatprep.subr.bf16.mxu0 0
    %259 = vmatpush1.bf16.msra.mxu0 0
    %260 = vmatprep.subr.bf16.mxu0 0
    %261 = vmatpush1.bf16.msra.mxu0 0
    %262 = vmatprep.subr.bf16.mxu0 0
    %263 = vmatpush1.bf16.msra.mxu0 0
    %264 = vmatprep.subr.bf16.mxu0 0
    %265 = vmatpush1.bf16.msra.mxu0 0
    %266 = vmatprep.subr.bf16.mxu0 0
    %267 = vmatpush1.bf16.msra.mxu0 0
    %268 = vmatprep.subr.bf16.mxu0 0
    %269 = vmatpush1.bf16.msra.mxu0 0
    %270 = vmatprep.subr.bf16.mxu0 0
    %271 = vmatpush1.bf16.msra.mxu0 0
    %272 = vmatprep.subr.bf16.mxu0 0
    %273 = vmatpush1.bf16.msra.mxu0 0
    %274 = vmatprep.subr.bf16.mxu0 0
    %275 = vmatpush1.bf16.msra.mxu0 0
    %276 = vmatprep.subr.bf16.mxu0 0
    %277 = vmatpush1.bf16.msra.mxu0 0
    %278 = vmatprep.subr.bf16.mxu0 0
    %279 = vmatpush1.bf16.msra.mxu0 0
    %280 = vmatprep.subr.bf16.mxu0 0
    %281 = vmatpush1.bf16.msra.mxu0 0
    %282 = vmatprep.subr.bf16.mxu0 0
    %283 = vmatpush1.bf16.msra.mxu0 0
    %284 = vmatprep.mubr.bf16.mxu0 0
    %285 = vmatmul.mubr.bf16.gmra.mrb[0].mxu0 %v240
    %v286 = vpop.f32.mrb[0].mxu0
    %v287 = vadd.f32 0.0, %v286
    %v288 = vpop.f32.mrb[0].mxu0
    %v289 = vpop.f32.mrb[0].mxu0
    %v290 = vadd.f32 0.0, %v289
    %v291 = vpop.f32.mrb[0].mxu0
    %292 = vmatprep.mubr.bf16.mxu0 0
    %293 = vmatmul.mubr.bf16.gmra.mrb[0].mxu0 %v243
    %v294 = vpop.f32.mrb[0].mxu0
    %v295 = vadd.f32 0.0, %v294
    %v296 = vpop.f32.mrb[0].mxu0
    %v297 = vpop.f32.mrb[0].mxu0
    %v298 = vpop.f32.mrb[0].mxu0
    %299 = vdwg.mxu0
    %v300 = vadd.f32 %v207, %v287
    %v301 = vadd.f32 %v210, %v290
    %v302 = vadd.f32 %v215, %v295
    %v303 = vld [vmem:[%s6] sm:$0x1]
    %v305 = vlaneseq
    %v306 = vshrl.u32 %v305, 7
    %v307 = vsub.s32 0, %v306
    %v308 = vrot.slane %v303, %v307
    %v310 = vadd.f32 %v300, %v308
    %v311 = vadd.f32 %v301, %v308
    %v312 = vadd.f32 %v302, %v308
    %vm313 = vcmp.gt.f32.partialorder %v310, 0.0
    %vm314 = vcmp.gt.f32.partialorder %v311, 0.0
    %vm315 = vcmp.gt.f32.partialorder %v312, 0.0
    %v316 = vmin.f32 %v310, 0.0
    %v317 = vmin.f32 %v311, 0.0
    %v318 = vmin.f32 %v312, 0.0
    %v319 = vmul.f32 %v316, 1.442695
    %v320 = vpow.pop %v319
    %v321 = vmul.f32 %v317, 1.442695
    %v322 = vpow.pop %v321
    %v323 = vmul.f32 %v318, 1.442695
    %v324 = vpow.pop %v323
    %v325 = vsub.f32 %v320, 1.0
    %v326 = vsub.f32 %v322, 1.0
    %v327 = vsub.f32 %v324, 1.0
    %v328 = vmul.f32 %v325, 1.6732632
    %v329 = vmul.f32 %v326, 1.6732632
    %v330 = vmul.f32 %v327, 1.6732632
    %v331 = vsel %vm313, %v310, %v328
    %v332 = vsel %vm314, %v311, %v329
    %v333 = vsel %vm315, %v312, %v330
    %v334 = vmul.f32 %v331, 1.050701
    %v335 = vmul.f32 %v332, 1.050701
    %v336 = vmul.f32 %v333, 1.050701
    %v337 = vpack.c.bf16 %v335, %v334
    %v338 = vpack.c.bf16 %v336, %v336
    %v339 = vld [vmem:[%s7] sm:$0xf]
    %v340 = vld [vmem:[%s7 + $0x4] sm:$0xf]
    %v341 = vld [vmem:[%s7 + $0x8] sm:$0xf]
    %v342 = vld [vmem:[%s7 + $0xc] sm:$0xf]
    %v343 = vld [vmem:[%s8] sm:$0x1]
    %v345 = vlaneseq
    %v346 = vshrl.u32 %v345, 7
    %v347 = vsub.s32 0, %v346
    %v348 = vrot.slane %v343, %v347
    %v354 = vunpack.c.l.b16 %v339
    %v355 = vunpack.c.l.b16 %v340
    %v356 = vunpack.c.l.b16 %v341
    %v357 = vunpack.c.l.b16 %v342
    %v358 = vpack.c.b16 %v355, %v354
    %v359 = vpack.c.b16 %v357, %v356
    %vm362 = vcmask 261120
    %v364 = vsel %vm362, %v337, 0
    %v367 = vsel %vm362, %v338, 0
    %369 = vmatprep.subr.bf16.mxu0 0
    %370 = vmatpush1.bf16.msra.mxu0 %v358
    %371 = vmatprep.subr.bf16.mxu0 0
    %372 = vmatpush1.bf16.msra.mxu0 %v359
    %373 = vmatprep.subr.bf16.mxu0 0
    %374 = vmatpush1.bf16.msra.mxu0 0
    %375 = vmatprep.subr.bf16.mxu0 0
    %376 = vmatpush1.bf16.msra.mxu0 0
    %377 = vmatprep.subr.bf16.mxu0 0
    %378 = vmatpush1.bf16.msra.mxu0 0
    %379 = vmatprep.subr.bf16.mxu0 0
    %380 = vmatpush1.bf16.msra.mxu0 0
    %381 = vmatprep.subr.bf16.mxu0 0
    %382 = vmatpush1.bf16.msra.mxu0 0
    %383 = vmatprep.subr.bf16.mxu0 0
    %384 = vmatpush1.bf16.msra.mxu0 0
    %385 = vmatprep.subr.bf16.mxu0 0
    %386 = vmatpush1.bf16.msra.mxu0 0
    %387 = vmatprep.subr.bf16.mxu0 0
    %388 = vmatpush1.bf16.msra.mxu0 0
    %389 = vmatprep.subr.bf16.mxu0 0
    %390 = vmatpush1.bf16.msra.mxu0 0
    %391 = vmatprep.subr.bf16.mxu0 0
    %392 = vmatpush1.bf16.msra.mxu0 0
    %393 = vmatprep.subr.bf16.mxu0 0
    %394 = vmatpush1.bf16.msra.mxu0 0
    %395 = vmatprep.subr.bf16.mxu0 0
    %396 = vmatpush1.bf16.msra.mxu0 0
    %397 = vmatprep.subr.bf16.mxu0 0
    %398 = vmatpush1.bf16.msra.mxu0 0
    %399 = vmatprep.subr.bf16.mxu0 0
    %400 = vmatpush1.bf16.msra.mxu0 0
    %401 = vmatprep.mubr.bf16.mxu0 0
    %402 = vmatmul.mubr.bf16.gmra.mrb[0].mxu0 %v364
    %v403 = vpop.f32.mrb[0].mxu0
    %v404 = vadd.f32 %v348, %v403
    %v405 = vpop.f32.mrb[0].mxu0
    %v406 = vpop.f32.mrb[0].mxu0
    %v407 = vadd.f32 %v348, %v406
    %v408 = vpop.f32.mrb[0].mxu0
    %409 = vmatprep.mubr.bf16.mxu0 0
    %410 = vmatmul.mubr.bf16.gmra.mrb[0].mxu0 %v367
    %v411 = vpop.f32.mrb[0].mxu0
    %v412 = vadd.f32 %v348, %v411
    %v413 = vpop.f32.mrb[0].mxu0
    %v414 = vpop.f32.mrb[0].mxu0
    %v415 = vpop.f32.mrb[0].mxu0
    %416 = vdwg.mxu0
    %vm417 = vcmp.gt.f32.partialorder %v404, 0.0
    %vm418 = vcmp.gt.f32.partialorder %v407, 0.0
    %vm419 = vcmp.gt.f32.partialorder %v412, 0.0
    %v420 = vmin.f32 %v404, 0.0
    %v421 = vmin.f32 %v407, 0.0
    %v422 = vmin.f32 %v412, 0.0
    %v423 = vmul.f32 %v420, 1.442695
    %v424 = vpow.pop %v423
    %v425 = vmul.f32 %v421, 1.442695
    %v426 = vpow.pop %v425
    %v427 = vmul.f32 %v422, 1.442695
    %v428 = vpow.pop %v427
    %v429 = vsub.f32 %v424, 1.0
    %v430 = vsub.f32 %v426, 1.0
    %v431 = vsub.f32 %v428, 1.0
    %v432 = vmul.f32 %v429, 1.6732632
    %v433 = vmul.f32 %v430, 1.6732632
    %v434 = vmul.f32 %v431, 1.6732632
    %v435 = vsel %vm417, %v404, %v432
    %v436 = vsel %vm418, %v407, %v433
    %v437 = vsel %vm419, %v412, %v434
    %v438 = vmul.f32 %v435, 1.050701
    %v439 = vmul.f32 %v436, 1.050701
    %v440 = vmul.f32 %v437, 1.050701
    %v441 = vld [vmem:[%s9] sm:$0xf]
    %v442 = vld [vmem:[%s9 + $0x4] sm:$0x1]
    %v443 = vpack.c.bf16 %v439, %v438
    %v444 = vpack.c.bf16 %v440, %v440
    %v445 = vld [vmem:[%s10] sm:$0xff]
    %v446 = vld [vmem:[%s10 + $0x8] sm:$0x3]
    %448 = vset.pattern.permute.xlu0 0
    %449 = vperm.xlu0 %448, %v445
    %v450 = vpop.permute.xlu0 %449
    %453 = vset.pattern.permute.xlu0 0
    %454 = vperm.xlu0 %453, %v446
    %v455 = vpop.permute.xlu0 %454
    %v459 = vunpack.c.l.b16 %v441
    %v460 = vunpack.c.l.b16 %v442
    %v461 = vpack.c.b16 %v460, %v459
    %v463 = vsel %vm362, %v461, 0
    %v466 = vsel %vm362, %v443, 0
    %v469 = vsel %vm362, %v444, 0
    %471 = vmatprep.subr.bf16.mxu0 0
    %472 = vmatpush1.bf16.xpose.msra.mxu0 %v466
    %473 = vmatprep.subr.bf16.mxu0 0
    %474 = vmatpush1.bf16.xpose.msra.mxu0 %v469
    %475 = vmatprep.subr.bf16.mxu0 0
    %476 = vmatpush1.bf16.xpose.msra.mxu0 0
    %477 = vmatprep.subr.bf16.mxu0 0
    %478 = vmatpush1.bf16.xpose.msra.mxu0 0
    %479 = vmatprep.subr.bf16.mxu0 0
    %480 = vmatpush1.bf16.xpose.msra.mxu0 0
    %481 = vmatprep.subr.bf16.mxu0 0
    %482 = vmatpush1.bf16.xpose.msra.mxu0 0
    %483 = vmatprep.subr.bf16.mxu0 0
    %484 = vmatpush1.bf16.xpose.msra.mxu0 0
    %485 = vmatprep.subr.bf16.mxu0 0
    %486 = vmatpush1.bf16.xpose.msra.mxu0 0
    %487 = vmatprep.subr.bf16.mxu0 0
    %488 = vmatpush1.bf16.xpose.msra.mxu0 0
    %489 = vmatprep.subr.bf16.mxu0 0
    %490 = vmatpush1.bf16.xpose.msra.mxu0 0
    %491 = vmatprep.subr.bf16.mxu0 0
    %492 = vmatpush1.bf16.xpose.msra.mxu0 0
    %493 = vmatprep.subr.bf16.mxu0 0
    %494 = vmatpush1.bf16.xpose.msra.mxu0 0
    %495 = vmatprep.subr.bf16.mxu0 0
    %496 = vmatpush1.bf16.xpose.msra.mxu0 0
    %497 = vmatprep.subr.bf16.mxu0 0
    %498 = vmatpush1.bf16.xpose.msra.mxu0 0
    %499 = vmatprep.subr.bf16.mxu0 0
    %500 = vmatpush1.bf16.xpose.msra.mxu0 0
    %501 = vmatprep.subr.bf16.mxu0 0
    %502 = vmatpush1.bf16.xpose.msra.mxu0 0
    %503 = vmatprep.mubr.bf16.mxu0 0
    %504 = vmatmul.mubr.bf16.gmra.mrb[0].mxu0 %v463
    %v505 = vpop.f32.mrb[0].mxu0
    %v506 = vadd.f32 %v450, %v505
    %v507 = vpop.f32.mrb[0].mxu0
    %v508 = vpop.f32.mrb[0].mxu0
    %v509 = vadd.f32 %v455, %v508
    %v510 = vpop.f32.mrb[0].mxu0
    %511 = vdwg.mxu0
    %vm512 = vcmask 195584
    %513 = vst.msk [vmem:[#allocation2] sm:$0xff] %vm512, %v506
    %vm514 = vcmask 189440
    %515 = vst.msk [vmem:[#allocation2 + $0x8] sm:$0x3] %vm514, %v509
    // Predicated region
    $region46: #{tpu_custom_call.1} parent=1 // pred_check
      _
    $region47: #{tpu_custom_call.1} parent=1 // pred_check_branch
      %517 = sbr.rel (0) target = $region49
    $region48: #{tpu_custom_call.1} parent=1 // pred_region
      %s519 = ssub.s32 256, 256
      %520 = vsyncadd [#allocation3], %s519
      %s521 = sshll.u32 [#allocation2], 4
      %s522 = int_to_ptr.vmem [resolvable:$true] %s521
      %527 = dma.vmem_to_hbm [thread:$0]  %s522, 256, %s11, [#allocation3], 128, 128, 8
    $region49: #{tpu_custom_call.1} parent=1 // pred_fallthru
      _
    // Predicated region
    $region50: #{tpu_custom_call.1} parent=1 // pred_check
      _
    $region51: #{tpu_custom_call.1} parent=1 // pred_check_branch
      %529 = sbr.rel (0) target = $region53
    $region52: #{tpu_custom_call.1} parent=1 // pred_region
      %530 = dma.done [#allocation3], 256
    $region53: #{tpu_custom_call.1} parent=1 // pred_fallthru
      _
    %531 = vsyncpa [#allocation3], 1

</llo_original>
